<compile_context>
chip_gen: v7x
topology: tpu7x:2x2x1
jax: 0.10.0
libtpu: 0.0.40
codegen_flags: <defaults>
</compile_context>

<pallas_src>
import functools
import math

import jax
import jax.numpy as jnp
from jax.experimental import pallas as pl
from jax.experimental.pallas import tpu as pltpu


def _sdpa_kernel(*refs, masked: bool, return_attn: bool):
    # Inputs : q (BT,Q,D), k (BT,K,D), v (BT,K,Dv), [vl (BT,Q,1) int32 if masked]
    # Outputs: o (BT,Q,Dv), [attn (BT,Q,K) f32 if return_attn]
    if masked:
        q_ref, k_ref, v_ref, vl_ref = refs[:4]
        out_refs = refs[4:]
    else:
        q_ref, k_ref, v_ref = refs[:3]
        vl_ref = None
        out_refs = refs[3:]
    o_ref = out_refs[0]
    attn_ref = out_refs[1] if return_attn else None

    q = q_ref[...]
    k = k_ref[...]
    v = v_ref[...]

    d = q.shape[-1]
    inv_sqrt_d = jnp.float32(1.0 / math.sqrt(d))

    # scores = q @ k^T / sqrt(d)   -- batched MXU matmul, f32 accumulation,
    # K on the lane axis so the softmax reductions stay lane-dense.
    scores = jnp.einsum("bqd,bkd->bqk", q, k,
                        preferred_element_type=jnp.float32) * inv_sqrt_d

    if masked:
        vl = vl_ref[...]                                             # (BT,Q,1) int32
        kidx = jax.lax.broadcasted_iota(jnp.int32, scores.shape, 2)  # (BT,Q,K)
        scores = jnp.where(kidx < vl, scores, jnp.float32(-1000000.0))

    # Numerically stable softmax along K; reciprocal goes to the EUP slot.
    m = jnp.max(scores, axis=-1, keepdims=True)
    e = jnp.exp(scores - m)
    denom = jnp.sum(e, axis=-1, keepdims=True)
    attn = e * pl.reciprocal(denom, approx=True)                     # (BT,Q,K)

    if attn_ref is not None:
        attn_ref[...] = attn.astype(attn_ref.dtype)

    # TODO(synk): dropout is identity (eval mode); training parity would need an
    # in-kernel PRNG mask (pltpu.prng_seed / pltpu.prng_random_bits).
    o_ref[...] = jnp.einsum("bqk,bkd->bqd", attn.astype(v.dtype), v,
                            preferred_element_type=jnp.float32).astype(o_ref.dtype)


def scaled_dot_product_attention(q, k, v, valid_lens=None, *,
                                 batch_tile=None, return_attn=True,
                                 vmem_budget_bytes=8 * 1024 * 1024):
    """q: (B,Q,D), k: (B,K,D), v: (B,K,Dv).
       valid_lens: None, (B,) int, or (B,Q) int.
       Returns (out (B,Q,Dv), attn (B,Q,K) or None)."""
    B, Q, D = q.shape
    _, K, Dv = v.shape
    masked = valid_lens is not None

    inputs = [q, k, v]
    if masked:
        # Normalize valid_lens to per-query (B, Q, 1) int32, matching the torch
        # repeat_interleave (per-batch) / reshape (per-query) behaviour.
        if valid_lens.ndim == 1:
            vl = jnp.broadcast_to(valid_lens.astype(jnp.int32)[:, None, None],
                                  (B, Q, 1))
        else:
            vl = valid_lens.astype(jnp.int32)[:, :, None]
        inputs.append(vl)

    # Pick the largest batch tile whose working set fits a conservative VMEM
    # budget (f32 upper bound on q/k/v/out tiles + scores/attn intermediates).
    if batch_tile is None:
        per_b = 4 * (Q * D + K * D + K * Dv + Q * Dv + 2 * Q * K + Q)
        batch_tile = max(1, min(B, vmem_budget_bytes // max(per_b, 1)))
    BT = batch_tile
    grid = (pl.cdiv(B, BT),)

    in_specs = [
        pl.BlockSpec((BT, Q, D), lambda i: (i, 0, 0)),
        pl.BlockSpec((BT, K, D), lambda i: (i, 0, 0)),
        pl.BlockSpec((BT, K, Dv), lambda i: (i, 0, 0)),
    ]
    if masked:
        in_specs.append(pl.BlockSpec((BT, Q, 1), lambda i: (i, 0, 0)))

    out_shape = [jax.ShapeDtypeStruct((B, Q, Dv), q.dtype)]
    out_specs = [pl.BlockSpec((BT, Q, Dv), lambda i: (i, 0, 0))]
    if return_attn:
        out_shape.append(jax.ShapeDtypeStruct((B, Q, K), jnp.float32))
        out_specs.append(pl.BlockSpec((BT, Q, K), lambda i: (i, 0, 0)))

    kernel = functools.partial(_sdpa_kernel, masked=masked,
                               return_attn=return_attn)

    results = pl.pallas_call(
        kernel,
        grid=grid,
        in_specs=in_specs,
        out_specs=out_specs,
        out_shape=out_shape,
        compiler_params=pltpu.CompilerParams(
            dimension_semantics=("parallel",)),  # batch steps are independent
    )(*inputs)

    if return_attn:
        return results[0], results[1]
    return results[0], None


def reference(q, k, v, valid_lens):
    d = q.shape[-1]
    scores = jnp.einsum("bqd,bkd->bqk", q, k) / math.sqrt(d)
    if valid_lens is not None:
        kidx = jnp.arange(scores.shape[-1])[None, None, :]
        if valid_lens.ndim == 1:
            vl = valid_lens[:, None, None]
        else:
            vl = valid_lens[:, :, None]
        scores = jnp.where(kidx < vl, scores, -1000000.0)
    attn = jax.nn.softmax(scores, axis=-1)
    return jnp.einsum("bqk,bkd->bqd", attn, v), attn


if __name__ == "__main__":
    # Small shapes consistent with module usage: batch=2, 8 queries,
    # 8 key-value pairs, d=16, value dim=16.
    B, Q, K, D, Dv = 2, 8, 8, 16, 16

    key = jax.random.PRNGKey(0)
    kq, kk, kv_ = jax.random.split(key, 3)
    q = jax.random.normal(kq, (B, Q, D), dtype=jnp.float32)
    k = jax.random.normal(kk, (B, K, D), dtype=jnp.float32)
    v = jax.random.normal(kv_, (B, K, Dv), dtype=jnp.float32)

    # 1) per-batch valid_lens
    valid_lens = jnp.array([3, 6], dtype=jnp.int32)
    out, attn = scaled_dot_product_attention(q, k, v, valid_lens)
    out = jax.block_until_ready(out)
    attn = jax.block_until_ready(attn)
    ref_out, ref_attn = reference(q, k, v, valid_lens)
    # Tolerance accounts for the EUP approximate-reciprocal normalization.
    assert jnp.allclose(out, ref_out, atol=2e-3, rtol=2e-3)
    assert jnp.allclose(attn, ref_attn, atol=2e-3, rtol=2e-3)

    # 2) per-query valid_lens (B, Q)
    valid_lens_2d = jnp.tile(jnp.arange(1, Q + 1, dtype=jnp.int32), (B, 1))
    out2, attn2 = scaled_dot_product_attention(q, k, v, valid_lens_2d)
    out2 = jax.block_until_ready(out2)
    ref_out2, ref_attn2 = reference(q, k, v, valid_lens_2d)
    assert jnp.allclose(out2, ref_out2, atol=2e-3, rtol=2e-3)
    assert jnp.allclose(attn2, ref_attn2, atol=2e-3, rtol=2e-3)

    # 3) valid_lens=None (plain softmax), no attn writeback
    out3, _ = scaled_dot_product_attention(q, k, v, None, return_attn=False)
    out3 = jax.block_until_ready(out3)
    ref_out3, _ = reference(q, k, v, None)
    assert jnp.allclose(out3, ref_out3, atol=2e-3, rtol=2e-3)

    print("KERNEL_OK")
</pallas_src>

<mosaic_0001>
module attributes {stable_mosaic.version = 11 : i64} {
  func.func @_sdpa_kernel(%arg0: i32, %arg1: memref<2x8x16xf32, #tpu.memory_space<vmem>>, %arg2: memref<2x8x16xf32, #tpu.memory_space<vmem>>, %arg3: memref<2x8x16xf32, #tpu.memory_space<vmem>>, %arg4: memref<2x8x1xi32, #tpu.memory_space<vmem>>, %arg5: memref<2x8x16xf32, #tpu.memory_space<vmem>>, %arg6: memref<2x8x8xf32, #tpu.memory_space<vmem>>) attributes {dimension_semantics = [#tpu.dimension_semantics<parallel>], iteration_bounds = array<i64: 1>, scalar_prefetch = 0 : i64, scratch_operands = 0 : i64, tpu.core_type = #tpu.core_type<tc>, window_params = [{transform_indices = @transform_0, window_bounds = array<i64: 2, 8, 16>}, {transform_indices = @transform_1, window_bounds = array<i64: 2, 8, 16>}, {transform_indices = @transform_2, window_bounds = array<i64: 2, 8, 16>}, {transform_indices = @transform_3, window_bounds = array<i64: 2, 8, 1>}, {transform_indices = @transform_4, window_bounds = array<i64: 2, 8, 16>}, {transform_indices = @transform_5, window_bounds = array<i64: 2, 8, 8>}]} {
    %c0 = arith.constant 0 : index
    %c0_0 = arith.constant 0 : index
    %c0_1 = arith.constant 0 : index
    %0 = vector.load %arg1[%c0, %c0_0, %c0_1] : memref<2x8x16xf32, #tpu.memory_space<vmem>>, vector<2x8x16xf32>
    %c0_2 = arith.constant 0 : index
    %c0_3 = arith.constant 0 : index
    %c0_4 = arith.constant 0 : index
    %1 = vector.load %arg2[%c0_2, %c0_3, %c0_4] : memref<2x8x16xf32, #tpu.memory_space<vmem>>, vector<2x8x16xf32>
    %c0_5 = arith.constant 0 : index
    %c0_6 = arith.constant 0 : index
    %c0_7 = arith.constant 0 : index
    %2 = vector.load %arg3[%c0_5, %c0_6, %c0_7] : memref<2x8x16xf32, #tpu.memory_space<vmem>>, vector<2x8x16xf32>
    "tpu.trace_start"() <{level = 10 : i32, message = "bqd,bkd->bqk"}> : () -> ()
    %cst = arith.constant dense<0.000000e+00> : vector<2x8x8xf32>
    %3 = tpu.matmul %0, %1, %cst {dimension_numbers = #tpu.dot_dimension_numbers<[2], [2], [1], [1], [0, 0, 0, 1, 1, 1], [0], [0]>} : vector<2x8x16xf32>, vector<2x8x16xf32>, vector<2x8x8xf32> -> vector<2x8x8xf32>
    "tpu.trace_stop"() : () -> ()
    %cst_8 = arith.constant 2.500000e-01 : f32
    %4 = vector.broadcast %cst_8 : f32 to vector<2x8x8xf32>
    %5 = arith.mulf %3, %4 : vector<2x8x8xf32>
    %c0_9 = arith.constant 0 : index
    %c0_10 = arith.constant 0 : index
    %c0_11 = arith.constant 0 : index
    %6 = vector.load %arg4[%c0_9, %c0_10, %c0_11] : memref<2x8x1xi32, #tpu.memory_space<vmem>>, vector<2x8x1xi32>
    %7 = tpu.iota {dimensions = array<i32: 2>} : vector<2x8x8xi32>
    %8 = vector.broadcast %6 : vector<2x8x1xi32> to vector<2x8x8xi32>
    %9 = arith.cmpi slt, %7, %8 : vector<2x8x8xi32>
    %cst_12 = arith.constant -1.000000e+06 : f32
    %10 = vector.broadcast %cst_12 : f32 to vector<2x8x8xf32>
    %11 = arith.select %9, %5, %10 : vector<2x8x8xi1>, vector<2x8x8xf32>
    %cst_13 = arith.constant dense<0xFF800000> : vector<2x8xf32>
    %12 = vector.multi_reduction <maximumf>, %11, %cst_13 [2] : vector<2x8x8xf32> to vector<2x8xf32>
    %13 = vector.shape_cast %12 : vector<2x8xf32> to vector<2x8x1xf32>
    %14 = vector.broadcast %13 : vector<2x8x1xf32> to vector<2x8x8xf32>
    %15 = arith.subf %11, %14 : vector<2x8x8xf32>
    %16 = math.exp %15 : vector<2x8x8xf32>
    %cst_14 = arith.constant dense<0.000000e+00> : vector<2x8xf32>
    %17 = vector.multi_reduction <add>, %16, %cst_14 [2] : vector<2x8x8xf32> to vector<2x8xf32>
    %18 = vector.shape_cast %17 : vector<2x8xf32> to vector<2x8x1xf32>
    %19 = tpu.reciprocal %18 {approx = true} : vector<2x8x1xf32> -> vector<2x8x1xf32>
    %20 = vector.broadcast %19 : vector<2x8x1xf32> to vector<2x8x8xf32>
    %21 = arith.mulf %16, %20 : vector<2x8x8xf32>
    %c0_15 = arith.constant 0 : index
    %c0_16 = arith.constant 0 : index
    %c0_17 = arith.constant 0 : index
    %22 = vector.load %arg6[%c0_15, %c0_16, %c0_17] : memref<2x8x8xf32, #tpu.memory_space<vmem>>, vector<2x8x8xf32>
    tpu.vector_store %arg6[%c0_15, %c0_16, %c0_17], %21 {strides = array<i32>} : memref<2x8x8xf32, #tpu.memory_space<vmem>>, vector<2x8x8xf32>,
    "tpu.trace_start"() <{level = 10 : i32, message = "bqk,bkd->bqd"}> : () -> ()
    %cst_18 = arith.constant dense<0.000000e+00> : vector<2x8x16xf32>
    %23 = tpu.matmul %21, %2, %cst_18 {dimension_numbers = #tpu.dot_dimension_numbers<[2], [1], [1], [2], [0, 0, 0, 1, 1, 2], [0], [0]>} : vector<2x8x8xf32>, vector<2x8x16xf32>, vector<2x8x16xf32> -> vector<2x8x16xf32>
    "tpu.trace_stop"() : () -> ()
    %c0_19 = arith.constant 0 : index
    %c0_20 = arith.constant 0 : index
    %c0_21 = arith.constant 0 : index
    %24 = vector.load %arg5[%c0_19, %c0_20, %c0_21] : memref<2x8x16xf32, #tpu.memory_space<vmem>>, vector<2x8x16xf32>
    tpu.vector_store %arg5[%c0_19, %c0_20, %c0_21], %23 {strides = array<i32>} : memref<2x8x16xf32, #tpu.memory_space<vmem>>, vector<2x8x16xf32>,
    return
  }
  func.func @transform_0(%arg0: i32) -> (i32, i32, i32) {
    %c0_i32 = arith.constant 0 : i32
    %c0_i32_0 = arith.constant 0 : i32
    %c0_i32_1 = arith.constant 0 : i32
    return %arg0, %c0_i32, %c0_i32_0 : i32, i32, i32
  }
  func.func @transform_1(%arg0: i32) -> (i32, i32, i32) {
    %c0_i32 = arith.constant 0 : i32
    %c0_i32_0 = arith.constant 0 : i32
    %c0_i32_1 = arith.constant 0 : i32
    return %arg0, %c0_i32, %c0_i32_0 : i32, i32, i32
  }
  func.func @transform_2(%arg0: i32) -> (i32, i32, i32) {
    %c0_i32 = arith.constant 0 : i32
    %c0_i32_0 = arith.constant 0 : i32
    %c0_i32_1 = arith.constant 0 : i32
    return %arg0, %c0_i32, %c0_i32_0 : i32, i32, i32
  }
  func.func @transform_3(%arg0: i32) -> (i32, i32, i32) {
    %c0_i32 = arith.constant 0 : i32
    %c0_i32_0 = arith.constant 0 : i32
    %c0_i32_1 = arith.constant 0 : i32
    return %arg0, %c0_i32, %c0_i32_0 : i32, i32, i32
  }
  func.func @transform_4(%arg0: i32) -> (i32, i32, i32) {
    %c0_i32 = arith.constant 0 : i32
    %c0_i32_0 = arith.constant 0 : i32
    %c0_i32_1 = arith.constant 0 : i32
    return %arg0, %c0_i32, %c0_i32_0 : i32, i32, i32
  }
  func.func @transform_5(%arg0: i32) -> (i32, i32, i32) {
    %c0_i32 = arith.constant 0 : i32
    %c0_i32_0 = arith.constant 0 : i32
    %c0_i32_1 = arith.constant 0 : i32
    return %arg0, %c0_i32, %c0_i32_0 : i32, i32, i32
  }
}

</mosaic_0001>

<llo_original>
// kernel: tpu_custom_call.1
$region0: #{tpu_custom_call.1}
  #allocation0 [shape = 'u32[]', space=smem, size = 0x4, offset = 0x4, fixed_abs, tag = 'smem constant byte address 0x4 - core index']
  #allocation1 [shape = 'u32[144,128]{1,0:T(1,128)}', space=vmem, size = 0x12000, scoped, tag = 'internal scratch']
  %s0 = inlined_call_operand.vmem [shape: f32[2,8,16], index: 0, kind: input, shape index: {}]
  %s1 = inlined_call_operand.hbm [shape: f32[2,8,16], index: 1, kind: input, shape index: {}]
  %s2 = inlined_call_operand.hbm [shape: f32[2,8,16], index: 2, kind: input, shape index: {}]
  %s3 = inlined_call_operand.vmem [shape: s32[2,8,1], index: 3, kind: input, shape index: {}]
  %s4 = inlined_call_operand.hbm [shape: f32[2,8,16], index: 4, kind: output, shape index: {0}]
  %s5 = inlined_call_operand.hbm [shape: f32[2,8,8], index: 5, kind: output, shape index: {1}]
  %6 = xla_tuple %s4, %s5
  %s7 = sld [smem:[#allocation0]]
  $region42: #{tpu_custom_call.1} parent=0
    _
  %s9 = ssub.s32 1, %s7
  %s10 = scalar_select 0, %s9, %s7
  $region1: #{tpu_custom_call.1} parent=0
    #allocation2 [shape = 'u8[8192]{0}', space=vmem, size = 0x2000, scoped, tag = 'input window, operand 1, single buffered']
    #allocation3 [shape = 's32[1]{0}', space=sflag, size = 0x4, scoped, tag = 'scoped memory for tpu_custom_call.1']
    #allocation4 [shape = 's32[1]{0}', space=sflag, size = 0x4, scoped, tag = 'scoped memory for tpu_custom_call.1']
    #allocation5 [shape = 'u8[8192]{0}', space=vmem, size = 0x2000, scoped, tag = 'input window, operand 2, single buffered']
    #allocation6 [shape = 's32[1]{0}', space=sflag, size = 0x4, scoped, tag = 'scoped memory for tpu_custom_call.1']
    #allocation7 [shape = 'u8[8192]{0}', space=vmem, size = 0x2000, scoped, tag = 'output window, operand 0, single buffered']
    #allocation8 [shape = 'u8[8192]{0}', space=vmem, size = 0x2000, scoped, tag = 'output window, operand 1, single buffered']
    #allocation9 [shape = 's32[1]{0}', space=sflag, size = 0x4, scoped, tag = 'scoped memory for tpu_custom_call.1']
    %11 = vsyncpa [#allocation3], 0
    %12 = vsyncpa [#allocation6], 0
    %13 = vsyncpa [#allocation4], 0
    %14 = vsyncpa [#allocation9], 0
    // Predicated region
    $region2: #{tpu_custom_call.1} parent=1 // pred_check
      _
    $region3: #{tpu_custom_call.1} parent=1 // pred_check_branch
      %16 = sbr.rel (0) target = $region5
    $region4: #{tpu_custom_call.1} parent=1 // pred_region
      _
    $region5: #{tpu_custom_call.1} parent=1 // pred_fallthru
      _
    // Predicated region
    $region6: #{tpu_custom_call.1} parent=1 // pred_check
      _
    $region7: #{tpu_custom_call.1} parent=1 // pred_check_branch
      %18 = sbr.rel (0) target = $region9
    $region8: #{tpu_custom_call.1} parent=1 // pred_region
      %s20 = ssub.s32 256, 256
      %21 = vsyncadd [#allocation3], %s20
      %s22 = sshll.u32 [#allocation2], 4
      %s23 = int_to_ptr.vmem [resolvable:$true] %s22
      %28 = dma.hbm_to_vmem [thread:$0]  %s1, 256, %s23, [#allocation3], 128, 128, 8
    $region9: #{tpu_custom_call.1} parent=1 // pred_fallthru
      _
    // Predicated region
    $region10: #{tpu_custom_call.1} parent=1 // pred_check
      _
    $region11: #{tpu_custom_call.1} parent=1 // pred_check_branch
      %30 = sbr.rel (0) target = $region13
    $region12: #{tpu_custom_call.1} parent=1 // pred_region
      %s32 = ssub.s32 256, 256
      %33 = vsyncadd [#allocation6], %s32
      %s34 = sshll.u32 [#allocation5], 4
      %s35 = int_to_ptr.vmem [resolvable:$true] %s34
      %40 = dma.hbm_to_vmem [thread:$0]  %s2, 256, %s35, [#allocation6], 128, 128, 8
    $region13: #{tpu_custom_call.1} parent=1 // pred_fallthru
      _
    // Predicated region
    $region14: #{tpu_custom_call.1} parent=1 // pred_check
      _
    $region15: #{tpu_custom_call.1} parent=1 // pred_check_branch
      %42 = sbr.rel (0) target = $region17
    $region16: #{tpu_custom_call.1} parent=1 // pred_region
      _
    $region17: #{tpu_custom_call.1} parent=1 // pred_fallthru
      _
    // Predicated region
    $region18: #{tpu_custom_call.1} parent=1 // pred_check
      _
    $region19: #{tpu_custom_call.1} parent=1 // pred_check_branch
      %44 = sbr.rel (0) target = $region21
    $region20: #{tpu_custom_call.1} parent=1 // pred_region
      %45 = dma.done [#allocation3], 256
    $region21: #{tpu_custom_call.1} parent=1 // pred_fallthru
      _
    // Predicated region
    $region22: #{tpu_custom_call.1} parent=1 // pred_check
      _
    $region23: #{tpu_custom_call.1} parent=1 // pred_check_branch
      %47 = sbr.rel (0) target = $region25
    $region24: #{tpu_custom_call.1} parent=1 // pred_region
      %48 = dma.done [#allocation6], 256
    $region25: #{tpu_custom_call.1} parent=1 // pred_fallthru
      _
    %v49 = vld [vmem:[%s0] sm:$0xff]
    %v50 = vld [vmem:[%s0 + $0x8] sm:$0xff]
    %v51 = vld [vmem:[#allocation2] sm:$0xff]
    %v52 = vld [vmem:[#allocation2 + $0x8] sm:$0xff]
    %v53 = vld [vmem:[#allocation5] sm:$0xff]
    %v54 = vld [vmem:[#allocation5 + $0x8] sm:$0xff]
    %vm55 = vcmask 130048
    %v57 = vsel %vm55, %v49, 0
    %v60 = vsel %vm55, %v51, 0
    %62 = vmatprep.subr.mxu0 0.0
    %63 = vmatpush1.xpose.msra.mxu0 %v60
    %64 = vmatprep.subr.mxu0 0.0
    %65 = vmatpush1.xpose.msra.mxu0 0.0
    %66 = vmatprep.subr.mxu0 0.0
    %67 = vmatpush1.xpose.msra.mxu0 0.0
    %68 = vmatprep.subr.mxu0 0.0
    %69 = vmatpush1.xpose.msra.mxu0 0.0
    %70 = vmatprep.subr.mxu0 0.0
    %71 = vmatpush1.xpose.msra.mxu0 0.0
    %72 = vmatprep.subr.mxu0 0.0
    %73 = vmatpush1.xpose.msra.mxu0 0.0
    %74 = vmatprep.subr.mxu0 0.0
    %75 = vmatpush1.xpose.msra.mxu0 0.0
    %76 = vmatprep.subr.mxu0 0.0
    %77 = vmatpush1.xpose.msra.mxu0 0.0
    %78 = vmatprep.subr.mxu0 0.0
    %79 = vmatpush1.xpose.msra.mxu0 0.0
    %80 = vmatprep.subr.mxu0 0.0
    %81 = vmatpush1.xpose.msra.mxu0 0.0
    %82 = vmatprep.subr.mxu0 0.0
    %83 = vmatpush1.xpose.msra.mxu0 0.0
    %84 = vmatprep.subr.mxu0 0.0
    %85 = vmatpush1.xpose.msra.mxu0 0.0
    %86 = vmatprep.subr.mxu0 0.0
    %87 = vmatpush1.xpose.msra.mxu0 0.0
    %88 = vmatprep.subr.mxu0 0.0
    %89 = vmatpush1.xpose.msra.mxu0 0.0
    %90 = vmatprep.subr.mxu0 0.0
    %91 = vmatpush1.xpose.msra.mxu0 0.0
    %92 = vmatprep.subr.mxu0 0.0
    %93 = vmatpush1.xpose.msra.mxu0 0.0
    %94 = vmatprep.subr.mxu0 0.0
    %95 = vmatpush1.xpose.msra.mxu0 0.0
    %96 = vmatprep.subr.mxu0 0.0
    %97 = vmatpush1.xpose.msra.mxu0 0.0
    %98 = vmatprep.subr.mxu0 0.0
    %99 = vmatpush1.xpose.msra.mxu0 0.0
    %100 = vmatprep.subr.mxu0 0.0
    %101 = vmatpush1.xpose.msra.mxu0 0.0
    %102 = vmatprep.subr.mxu0 0.0
    %103 = vmatpush1.xpose.msra.mxu0 0.0
    %104 = vmatprep.subr.mxu0 0.0
    %105 = vmatpush1.xpose.msra.mxu0 0.0
    %106 = vmatprep.subr.mxu0 0.0
    %107 = vmatpush1.xpose.msra.mxu0 0.0
    %108 = vmatprep.subr.mxu0 0.0
    %109 = vmatpush1.xpose.msra.mxu0 0.0
    %110 = vmatprep.subr.mxu0 0.0
    %111 = vmatpush1.xpose.msra.mxu0 0.0
    %112 = vmatprep.subr.mxu0 0.0
    %113 = vmatpush1.xpose.msra.mxu0 0.0
    %114 = vmatprep.subr.mxu0 0.0
    %115 = vmatpush1.xpose.msra.mxu0 0.0
    %116 = vmatprep.subr.mxu0 0.0
    %117 = vmatpush1.xpose.msra.mxu0 0.0
    %118 = vmatprep.subr.mxu0 0.0
    %119 = vmatpush1.xpose.msra.mxu0 0.0
    %120 = vmatprep.subr.mxu0 0.0
    %121 = vmatpush1.xpose.msra.mxu0 0.0
    %122 = vmatprep.subr.mxu0 0.0
    %123 = vmatpush1.xpose.msra.mxu0 0.0
    %124 = vmatprep.subr.mxu0 0.0
    %125 = vmatpush1.xpose.msra.mxu0 0.0
    %126 = vmatprep.mubr.f32.mxu0 0.0
    %127 = vmatmul.mubr.f32.gmra.mrb[0].mxu0 %v57
    %v128 = vpop.f32.mrb[0].mxu0
    %v129 = vadd.f32 0.0, %v128
    %v130 = vpop.f32.mrb[0].mxu0
    %131 = vdwg.mxu0
    %v133 = vsel %vm55, %v50, 0
    %v136 = vsel %vm55, %v52, 0
    %138 = vmatprep.subr.mxu0 0.0
    %139 = vmatpush1.xpose.msra.mxu0 %v136
    %140 = vmatprep.subr.mxu0 0.0
    %141 = vmatpush1.xpose.msra.mxu0 0.0
    %142 = vmatprep.subr.mxu0 0.0
    %143 = vmatpush1.xpose.msra.mxu0 0.0
    %144 = vmatprep.subr.mxu0 0.0
    %145 = vmatpush1.xpose.msra.mxu0 0.0
    %146 = vmatprep.subr.mxu0 0.0
    %147 = vmatpush1.xpose.msra.mxu0 0.0
    %148 = vmatprep.subr.mxu0 0.0
    %149 = vmatpush1.xpose.msra.mxu0 0.0
    %150 = vmatprep.subr.mxu0 0.0
    %151 = vmatpush1.xpose.msra.mxu0 0.0
    %152 = vmatprep.subr.mxu0 0.0
    %153 = vmatpush1.xpose.msra.mxu0 0.0
    %154 = vmatprep.subr.mxu0 0.0
    %155 = vmatpush1.xpose.msra.mxu0 0.0
    %156 = vmatprep.subr.mxu0 0.0
    %157 = vmatpush1.xpose.msra.mxu0 0.0
    %158 = vmatprep.subr.mxu0 0.0
    %159 = vmatpush1.xpose.msra.mxu0 0.0
    %160 = vmatprep.subr.mxu0 0.0
    %161 = vmatpush1.xpose.msra.mxu0 0.0
    %162 = vmatprep.subr.mxu0 0.0
    %163 = vmatpush1.xpose.msra.mxu0 0.0
    %164 = vmatprep.subr.mxu0 0.0
    %165 = vmatpush1.xpose.msra.mxu0 0.0
    %166 = vmatprep.subr.mxu0 0.0
    %167 = vmatpush1.xpose.msra.mxu0 0.0
    %168 = vmatprep.subr.mxu0 0.0
    %169 = vmatpush1.xpose.msra.mxu0 0.0
    %170 = vmatprep.subr.mxu0 0.0
    %171 = vmatpush1.xpose.msra.mxu0 0.0
    %172 = vmatprep.subr.mxu0 0.0
    %173 = vmatpush1.xpose.msra.mxu0 0.0
    %174 = vmatprep.subr.mxu0 0.0
    %175 = vmatpush1.xpose.msra.mxu0 0.0
    %176 = vmatprep.subr.mxu0 0.0
    %177 = vmatpush1.xpose.msra.mxu0 0.0
    %178 = vmatprep.subr.mxu0 0.0
    %179 = vmatpush1.xpose.msra.mxu0 0.0
    %180 = vmatprep.subr.mxu0 0.0
    %181 = vmatpush1.xpose.msra.mxu0 0.0
    %182 = vmatprep.subr.mxu0 0.0
    %183 = vmatpush1.xpose.msra.mxu0 0.0
    %184 = vmatprep.subr.mxu0 0.0
    %185 = vmatpush1.xpose.msra.mxu0 0.0
    %186 = vmatprep.subr.mxu0 0.0
    %187 = vmatpush1.xpose.msra.mxu0 0.0
    %188 = vmatprep.subr.mxu0 0.0
    %189 = vmatpush1.xpose.msra.mxu0 0.0
    %190 = vmatprep.subr.mxu0 0.0
    %191 = vmatpush1.xpose.msra.mxu0 0.0
    %192 = vmatprep.subr.mxu0 0.0
    %193 = vmatpush1.xpose.msra.mxu0 0.0
    %194 = vmatprep.subr.mxu0 0.0
    %195 = vmatpush1.xpose.msra.mxu0 0.0
    %196 = vmatprep.subr.mxu0 0.0
    %197 = vmatpush1.xpose.msra.mxu0 0.0
    %198 = vmatprep.subr.mxu0 0.0
    %199 = vmatpush1.xpose.msra.mxu0 0.0
    %200 = vmatprep.subr.mxu0 0.0
    %201 = vmatpush1.xpose.msra.mxu0 0.0
    %202 = vmatprep.mubr.f32.mxu0 0.0
    %203 = vmatmul.mubr.f32.gmra.mrb[0].mxu0 %v133
    %v204 = vpop.f32.mrb[0].mxu0
    %v205 = vadd.f32 0.0, %v204
    %v206 = vpop.f32.mrb[0].mxu0
    %207 = vdwg.mxu0
    %v208 = vmul.f32 %v129, 0.25
    %v209 = vmul.f32 %v205, 0.25
    %v210 = vld [vmem:[%s3] sm:$0xff]
    %v211 = vld [vmem:[%s3 + $0x8] sm:$0xff]
    %v212 = vlaneseq
    %v213 = vand.u32 %v212, 127
    %214 = vset.pattern.permute.xlu0 0
    %215 = vperm.xlu0 %214, %v210
    %v216 = vpop.permute.xlu0 %215
    %217 = vset.pattern.permute.xlu0 0
    %218 = vperm.xlu0 %217, %v211
    %v219 = vpop.permute.xlu0 %218
    %vm220 = vcmp.lt.s32.totalorder %v213, %v216
    %vm221 = vcmp.lt.s32.totalorder %v213, %v219
    %v222 = vsel %vm220, %v208, -1000000.0
    %v223 = vsel %vm221, %v209, -1000000.0
    %vm224 = vcmask 64512
    %v225 = vsel %vm224, %v222, -inf
    %226 = vmax.xlane.f32.xlu0 %v225
    %v227 = vpop.xlane.xlu0 %226
    %v228 = vsel %vm224, %v223, -inf
    %229 = vmax.xlane.f32.xlu0 %v228
    %v230 = vpop.xlane.xlu0 %229
    %v231 = vsub.f32 %v222, %v227
    %v232 = vsub.f32 %v223, %v230
    %v233 = vmul.f32 %v231, 1.442695
    %v234 = vpow.pop %v233
    %v235 = vmul.f32 %v232, 1.442695
    %v236 = vpow.pop %v235
    %v237 = vsel %vm224, %v234, 0.0
    %238 = vadd.xlane.f32.xlu0 %v237
    %v239 = vpop.xlane.xlu0 %238
    %v240 = vsel %vm224, %v236, 0.0
    %241 = vadd.xlane.f32.xlu0 %v240
    %v242 = vpop.xlane.xlu0 %241
    %v243 = vrcp.pop %v239
    %v244 = vrcp.pop %v242
    %v245 = vmul.f32 %v234, %v243
    %v246 = vmul.f32 %v236, %v244
    %247 = vst.msk [vmem:[#allocation8] sm:$0xff] %vm224, %v245
    %248 = vst.msk [vmem:[#allocation8 + $0x8] sm:$0xff] %vm224, %v246
    %v250 = vsel %vm224, %v245, 0
    %252 = vmatprep.subr.mxu0 0.0
    %253 = vmatpush1.msra.mxu0 %v53
    %254 = vmatprep.subr.mxu0 0.0
    %255 = vmatpush1.msra.mxu0 0.0
    %256 = vmatprep.subr.mxu0 0.0
    %257 = vmatpush1.msra.mxu0 0.0
    %258 = vmatprep.subr.mxu0 0.0
    %259 = vmatpush1.msra.mxu0 0.0
    %260 = vmatprep.subr.mxu0 0.0
    %261 = vmatpush1.msra.mxu0 0.0
    %262 = vmatprep.subr.mxu0 0.0
    %263 = vmatpush1.msra.mxu0 0.0
    %264 = vmatprep.subr.mxu0 0.0
    %265 = vmatpush1.msra.mxu0 0.0
    %266 = vmatprep.subr.mxu0 0.0
    %267 = vmatpush1.msra.mxu0 0.0
    %268 = vmatprep.subr.mxu0 0.0
    %269 = vmatpush1.msra.mxu0 0.0
    %270 = vmatprep.subr.mxu0 0.0
    %271 = vmatpush1.msra.mxu0 0.0
    %272 = vmatprep.subr.mxu0 0.0
    %273 = vmatpush1.msra.mxu0 0.0
    %274 = vmatprep.subr.mxu0 0.0
    %275 = vmatpush1.msra.mxu0 0.0
    %276 = vmatprep.subr.mxu0 0.0
    %277 = vmatpush1.msra.mxu0 0.0
    %278 = vmatprep.subr.mxu0 0.0
    %279 = vmatpush1.msra.mxu0 0.0
    %280 = vmatprep.subr.mxu0 0.0
    %281 = vmatpush1.msra.mxu0 0.0
    %282 = vmatprep.subr.mxu0 0.0
    %283 = vmatpush1.msra.mxu0 0.0
    %284 = vmatprep.subr.mxu0 0.0
    %285 = vmatpush1.msra.mxu0 0.0
    %286 = vmatprep.subr.mxu0 0.0
    %287 = vmatpush1.msra.mxu0 0.0
    %288 = vmatprep.subr.mxu0 0.0
    %289 = vmatpush1.msra.mxu0 0.0
    %290 = vmatprep.subr.mxu0 0.0
    %291 = vmatpush1.msra.mxu0 0.0
    %292 = vmatprep.subr.mxu0 0.0
    %293 = vmatpush1.msra.mxu0 0.0
    %294 = vmatprep.subr.mxu0 0.0
    %295 = vmatpush1.msra.mxu0 0.0
    %296 = vmatprep.subr.mxu0 0.0
    %297 = vmatpush1.msra.mxu0 0.0
    %298 = vmatprep.subr.mxu0 0.0
    %299 = vmatpush1.msra.mxu0 0.0
    %300 = vmatprep.subr.mxu0 0.0
    %301 = vmatpush1.msra.mxu0 0.0
    %302 = vmatprep.subr.mxu0 0.0
    %303 = vmatpush1.msra.mxu0 0.0
    %304 = vmatprep.subr.mxu0 0.0
    %305 = vmatpush1.msra.mxu0 0.0
    %306 = vmatprep.subr.mxu0 0.0
    %307 = vmatpush1.msra.mxu0 0.0
    %308 = vmatprep.subr.mxu0 0.0
    %309 = vmatpush1.msra.mxu0 0.0
    %310 = vmatprep.subr.mxu0 0.0
    %311 = vmatpush1.msra.mxu0 0.0
    %312 = vmatprep.subr.mxu0 0.0
    %313 = vmatpush1.msra.mxu0 0.0
    %314 = vmatprep.subr.mxu0 0.0
    %315 = vmatpush1.msra.mxu0 0.0
    %316 = vmatprep.mubr.f32.mxu0 0.0
    %317 = vmatmul.mubr.f32.gmra.mrb[0].mxu0 %v250
    %v318 = vpop.f32.mrb[0].mxu0
    %v319 = vadd.f32 0.0, %v318
    %v320 = vpop.f32.mrb[0].mxu0
    %321 = vdwg.mxu0
    %v323 = vsel %vm224, %v246, 0
    %325 = vmatprep.subr.mxu0 0.0
    %326 = vmatpush1.msra.mxu0 %v54
    %327 = vmatprep.subr.mxu0 0.0
    %328 = vmatpush1.msra.mxu0 0.0
    %329 = vmatprep.subr.mxu0 0.0
    %330 = vmatpush1.msra.mxu0 0.0
    %331 = vmatprep.subr.mxu0 0.0
    %332 = vmatpush1.msra.mxu0 0.0
    %333 = vmatprep.subr.mxu0 0.0
    %334 = vmatpush1.msra.mxu0 0.0
    %335 = vmatprep.subr.mxu0 0.0
    %336 = vmatpush1.msra.mxu0 0.0
    %337 = vmatprep.subr.mxu0 0.0
    %338 = vmatpush1.msra.mxu0 0.0
    %339 = vmatprep.subr.mxu0 0.0
    %340 = vmatpush1.msra.mxu0 0.0
    %341 = vmatprep.subr.mxu0 0.0
    %342 = vmatpush1.msra.mxu0 0.0
    %343 = vmatprep.subr.mxu0 0.0
    %344 = vmatpush1.msra.mxu0 0.0
    %345 = vmatprep.subr.mxu0 0.0
    %346 = vmatpush1.msra.mxu0 0.0
    %347 = vmatprep.subr.mxu0 0.0
    %348 = vmatpush1.msra.mxu0 0.0
    %349 = vmatprep.subr.mxu0 0.0
    %350 = vmatpush1.msra.mxu0 0.0
    %351 = vmatprep.subr.mxu0 0.0
    %352 = vmatpush1.msra.mxu0 0.0
    %353 = vmatprep.subr.mxu0 0.0
    %354 = vmatpush1.msra.mxu0 0.0
    %355 = vmatprep.subr.mxu0 0.0
    %356 = vmatpush1.msra.mxu0 0.0
    %357 = vmatprep.subr.mxu0 0.0
    %358 = vmatpush1.msra.mxu0 0.0
    %359 = vmatprep.subr.mxu0 0.0
    %360 = vmatpush1.msra.mxu0 0.0
    %361 = vmatprep.subr.mxu0 0.0
    %362 = vmatpush1.msra.mxu0 0.0
    %363 = vmatprep.subr.mxu0 0.0
    %364 = vmatpush1.msra.mxu0 0.0
    %365 = vmatprep.subr.mxu0 0.0
    %366 = vmatpush1.msra.mxu0 0.0
    %367 = vmatprep.subr.mxu0 0.0
    %368 = vmatpush1.msra.mxu0 0.0
    %369 = vmatprep.subr.mxu0 0.0
    %370 = vmatpush1.msra.mxu0 0.0
    %371 = vmatprep.subr.mxu0 0.0
    %372 = vmatpush1.msra.mxu0 0.0
    %373 = vmatprep.subr.mxu0 0.0
    %374 = vmatpush1.msra.mxu0 0.0
    %375 = vmatprep.subr.mxu0 0.0
    %376 = vmatpush1.msra.mxu0 0.0
    %377 = vmatprep.subr.mxu0 0.0
    %378 = vmatpush1.msra.mxu0 0.0
    %379 = vmatprep.subr.mxu0 0.0
    %380 = vmatpush1.msra.mxu0 0.0
    %381 = vmatprep.subr.mxu0 0.0
    %382 = vmatpush1.msra.mxu0 0.0
    %383 = vmatprep.subr.mxu0 0.0
    %384 = vmatpush1.msra.mxu0 0.0
    %385 = vmatprep.subr.mxu0 0.0
    %386 = vmatpush1.msra.mxu0 0.0
    %387 = vmatprep.subr.mxu0 0.0
    %388 = vmatpush1.msra.mxu0 0.0
    %389 = vmatprep.mubr.f32.mxu0 0.0
    %390 = vmatmul.mubr.f32.gmra.mrb[0].mxu0 %v323
    %v391 = vpop.f32.mrb[0].mxu0
    %v392 = vadd.f32 0.0, %v391
    %v393 = vpop.f32.mrb[0].mxu0
    %394 = vdwg.mxu0
    %395 = vst.msk [vmem:[#allocation7] sm:$0xff] %vm55, %v319
    %396 = vst.msk [vmem:[#allocation7 + $0x8] sm:$0xff] %vm55, %v392
    // Predicated region
    $region26: #{tpu_custom_call.1} parent=1 // pred_check
      _
    $region27: #{tpu_custom_call.1} parent=1 // pred_check_branch
      %398 = sbr.rel (0) target = $region29
    $region28: #{tpu_custom_call.1} parent=1 // pred_region
      %s400 = ssub.s32 256, 256
      %401 = vsyncadd [#allocation4], %s400
      %s402 = sshll.u32 [#allocation7], 4
      %s403 = int_to_ptr.vmem [resolvable:$true] %s402
      %408 = dma.vmem_to_hbm [thread:$0]  %s403, 256, %s4, [#allocation4], 128, 128, 8
    $region29: #{tpu_custom_call.1} parent=1 // pred_fallthru
      _
    // Predicated region
    $region30: #{tpu_custom_call.1} parent=1 // pred_check
      _
    $region31: #{tpu_custom_call.1} parent=1 // pred_check_branch
      %410 = sbr.rel (0) target = $region33
    $region32: #{tpu_custom_call.1} parent=1 // pred_region
      %s412 = ssub.s32 256, 256
      %413 = vsyncadd [#allocation9], %s412
      %s414 = sshll.u32 [#allocation8], 4
      %s415 = int_to_ptr.vmem [resolvable:$true] %s414
      %420 = dma.vmem_to_hbm [thread:$0]  %s415, 256, %s5, [#allocation9], 128, 128, 8
    $region33: #{tpu_custom_call.1} parent=1 // pred_fallthru
      _
    // Predicated region
    $region34: #{tpu_custom_call.1} parent=1 // pred_check
      _
    $region35: #{tpu_custom_call.1} parent=1 // pred_check_branch
      %422 = sbr.rel (0) target = $region37
    $region36: #{tpu_custom_call.1} parent=1 // pred_region
      %423 = dma.done [#allocation4], 256
    $region37: #{tpu_custom_call.1} parent=1 // pred_fallthru
      _
    // Predicated region
    $region38: #{tpu_custom_call.1} parent=1 // pred_check
      _
    $region39: #{tpu_custom_call.1} parent=1 // pred_check_branch
      %425 = sbr.rel (0) target = $region41
    $region40: #{tpu_custom_call.1} parent=1 // pred_region
      %426 = dma.done [#allocation9], 256
    $region41: #{tpu_custom_call.1} parent=1 // pred_fallthru
      _
    %427 = vsyncpa [#allocation3], 1
    %428 = vsyncpa [#allocation6], 1
    %429 = vsyncpa [#allocation4], 1
    %430 = vsyncpa [#allocation9], 1

</llo_original>
